<compile_context>
chip_gen: v5e
topology: v5e:2x2
jax: 0.10.0
libtpu: 0.0.40
codegen_flags: <defaults>
</compile_context>

<pallas_src>
import functools
import math

import jax
import jax.numpy as jnp
from jax import lax
from jax.experimental import pallas as pl
from jax.experimental.pallas import tpu as pltpu


def _attention_head_kernel(x_ref, w_ref, o_ref, *,
                           head_size: int, h_pad: int, mask_type: str,
                           compute_dtype):
    # x_ref: (1, T, E); w_ref: (E, 3*h_pad); o_ref: (1, T, h_pad)
    x = x_ref[0]                                                  # (T, E)
    w = w_ref[...]                                                # (E, 3*h_pad)
    if compute_dtype != x.dtype:
        x = x.astype(compute_dtype)
    if compute_dtype != w.dtype:
        w = w.astype(compute_dtype)

    # Fused QKV projection: one MXU pass, N = 3*h_pad (lane-dense), f32 accumulate.
    qkv = jnp.dot(x, w, preferred_element_type=jnp.float32)      # (T, 3*h_pad) f32
    q = qkv[:, 0 * h_pad:1 * h_pad]                               # 128-lane aligned slices
    k = qkv[:, 1 * h_pad:2 * h_pad]
    v = qkv[:, 2 * h_pad:3 * h_pad]

    # scores = q @ k^T without materializing a transpose: contract dim 1 of q with dim 1 of k.
    scores = lax.dot_general(q, k,
                             dimension_numbers=(((1,), (1,)), ((), ())),
                             preferred_element_type=jnp.float32)  # (T, T)

    T = scores.shape[0]
    if mask_type == "encoder":
        # torch.tril(ones): positions where col > row are masked out.
        row = lax.broadcasted_iota(jnp.int32, (T, T), 0)
        col = lax.broadcasted_iota(jnp.int32, (T, T), 1)
        neg_big = jnp.finfo(jnp.float32).min   # finite: no inf - inf -> NaN hazard
        scores = jnp.where(row >= col, scores, neg_big)
    # mask_type == "decoder": all-ones mask -> no masking (matches the PyTorch module).

    # Softmax in f32; the reference's post-softmax division by sqrt(head_size) is folded
    # into the reciprocal of the row sum -> a single multiply pass over (T, T).
    m = jnp.max(scores, axis=-1, keepdims=True)
    e = jnp.exp(scores - m)
    denom = jnp.sum(e, axis=-1, keepdims=True)
    inv = pl.reciprocal(denom, approx=False) * (1.0 / math.sqrt(head_size))
    attn = e * inv                                                # (T, T) f32

    if compute_dtype == jnp.bfloat16:
        out = jnp.dot(attn.astype(jnp.bfloat16), v.astype(jnp.bfloat16),
                      preferred_element_type=jnp.float32)
    else:
        out = jnp.dot(attn, v, preferred_element_type=jnp.float32)  # (T, h_pad)
    o_ref[0] = out.astype(o_ref.dtype)


def attention_head_pallas(x, wq, wk, wv, *, head_size: int, mask_type: str = "encoder",
                          compute_dtype=jnp.float32):
    """x: (B, T, E); wq/wk/wv: (E, H) (i.e. nn.Linear.weight.T). Returns (B, T, H)."""
    assert mask_type in ("encoder", "decoder")
    B, T, E = x.shape
    H = wq.shape[1]

    # Pad head dim up to a multiple of 128 so all matmul N dims / stores are lane-dense.
    h_pad = ((H + 127) // 128) * 128
    pad = h_pad - H

    def _pad(w):
        return jnp.pad(w, ((0, 0), (0, pad))) if pad else w

    # Fused QKV weight: (E, 3*h_pad), ordering [q | k | v].
    w_qkv = jnp.concatenate([_pad(wq), _pad(wk), _pad(wv)], axis=1)

    kernel = functools.partial(_attention_head_kernel,
                               head_size=head_size, h_pad=h_pad,
                               mask_type=mask_type, compute_dtype=compute_dtype)

    out_padded = pl.pallas_call(
        kernel,
        out_shape=jax.ShapeDtypeStruct((B, T, h_pad), x.dtype),
        grid_spec=pltpu.PrefetchScalarGridSpec(
            num_scalar_prefetch=0,
            grid=(B,),
            in_specs=[
                # per-batch (1, T, E) tile
                pl.BlockSpec((1, T, E), lambda b: (b, 0, 0)),
                # fused weights: constant block index -> stay resident across the grid
                pl.BlockSpec((E, 3 * h_pad), lambda b: (0, 0)),
            ],
            out_specs=pl.BlockSpec((1, T, h_pad), lambda b: (b, 0, 0)),
        ),
        compiler_params=pltpu.CompilerParams(
            dimension_semantics=("parallel",)),
    )(x, w_qkv)

    # Strip the zero-padded head columns (layout plumbing only, no compute).
    return out_padded[:, :, :H]


def attention_head_ref(x, wq, wk, wv, *, head_size: int, mask_type: str = "encoder"):
    q = x @ wq
    k = x @ wk
    v = x @ wv
    scores = q @ jnp.swapaxes(k, -2, -1)
    T = scores.shape[-1]
    if mask_type == "encoder":
        mask = jnp.tril(jnp.ones((T, T), dtype=x.dtype))
        scores = jnp.where(mask == 0, -jnp.inf, scores)
    attn = jax.nn.softmax(scores, axis=-1) / math.sqrt(head_size)
    return attn @ v


if __name__ == "__main__":
    # Small shapes consistent with the module: batch=2, context_window_len=8,
    # emb_dim=32, head_size=16, mask='encoder'.
    B, T, E, H = 2, 8, 32, 16
    mask_type = "encoder"

    key = jax.random.PRNGKey(0)
    kx, kq, kk, kv = jax.random.split(key, 4)
    x = jax.random.normal(kx, (B, T, E), dtype=jnp.float32)
    # Deterministic "Linear(emb_dim, head_size, bias=False)" weights, stored as (E, H) = W.T.
    bound = 1.0 / math.sqrt(E)
    wq = jax.random.uniform(kq, (E, H), dtype=jnp.float32, minval=-bound, maxval=bound)
    wk = jax.random.uniform(kk, (E, H), dtype=jnp.float32, minval=-bound, maxval=bound)
    wv = jax.random.uniform(kv, (E, H), dtype=jnp.float32, minval=-bound, maxval=bound)

    ref = attention_head_ref(x, wq, wk, wv, head_size=H, mask_type=mask_type)

    # f32 path: tight check against the reference.
    out = attention_head_pallas(x, wq, wk, wv, head_size=H, mask_type=mask_type,
                                compute_dtype=jnp.float32)
    out = jax.block_until_ready(out)
    assert out.shape == (B, T, H)
    assert jnp.allclose(out, ref, atol=1e-5, rtol=1e-5), "f32 kernel mismatch vs reference"

    # bf16 MXU-operand path (v6e/v7x-oriented): looser tolerance vs the f32 reference.
    out_bf16 = attention_head_pallas(x, wq, wk, wv, head_size=H, mask_type=mask_type,
                                     compute_dtype=jnp.bfloat16)
    out_bf16 = jax.block_until_ready(out_bf16)
    assert out_bf16.shape == (B, T, H)
    assert jnp.allclose(out_bf16, ref, atol=5e-2, rtol=5e-2), "bf16 kernel mismatch vs reference"

    # Also exercise the 'decoder' (no-mask) branch once for coverage.
    ref_dec = attention_head_ref(x, wq, wk, wv, head_size=H, mask_type="decoder")
    out_dec = attention_head_pallas(x, wq, wk, wv, head_size=H, mask_type="decoder",
                                    compute_dtype=jnp.float32)
    out_dec = jax.block_until_ready(out_dec)
    assert jnp.allclose(out_dec, ref_dec, atol=1e-5, rtol=1e-5), "decoder-mask kernel mismatch"

    print("KERNEL_OK")
</pallas_src>

<mosaic_0001>
module attributes {stable_mosaic.version = 11 : i64} {
  func.func @_attention_head_kernel(%arg0: i32, %arg1: memref<1x8x32xf32, #tpu.memory_space<vmem>>, %arg2: memref<32x384xf32, #tpu.memory_space<vmem>>, %arg3: memref<1x8x128xf32, #tpu.memory_space<vmem>>) attributes {dimension_semantics = [#tpu.dimension_semantics<parallel>], iteration_bounds = array<i64: 2>, scalar_prefetch = 0 : i64, scratch_operands = 0 : i64, tpu.core_type = #tpu.core_type<tc>, window_params = [{transform_indices = @transform_0, window_bounds = array<i64: 1, 8, 32>}, {pipeline_mode = #tpu.pipeline_mode<synchronous>, transform_indices = @transform_1, window_bounds = array<i64: 32, 384>}, {transform_indices = @transform_2, window_bounds = array<i64: 1, 8, 128>}]} {
    %c0 = arith.constant 0 : index
    %c0_0 = arith.constant 0 : index
    %c0_1 = arith.constant 0 : index
    %0 = vector.load %arg1[%c0, %c0_0, %c0_1] : memref<1x8x32xf32, #tpu.memory_space<vmem>>, vector<1x8x32xf32>
    %1 = vector.shape_cast %0 : vector<1x8x32xf32> to vector<8x32xf32>
    %c0_2 = arith.constant 0 : index
    %c0_3 = arith.constant 0 : index
    %2 = vector.load %arg2[%c0_2, %c0_3] : memref<32x384xf32, #tpu.memory_space<vmem>>, vector<32x384xf32>
    %cst = arith.constant dense<0.000000e+00> : vector<8x384xf32>
    %3 = tpu.matmul %1, %2, %cst {dimension_numbers = #tpu.dot_dimension_numbers<[1], [0], [0], [1], [0, 0, 1, 1], [], []>} : vector<8x32xf32>, vector<32x384xf32>, vector<8x384xf32> -> vector<8x384xf32>
    %4 = vector.extract_strided_slice %3 {offsets = [0, 0], sizes = [8, 128], strides = [1, 1]} : vector<8x384xf32> to vector<8x128xf32>
    %5 = vector.extract_strided_slice %3 {offsets = [0, 128], sizes = [8, 128], strides = [1, 1]} : vector<8x384xf32> to vector<8x128xf32>
    %6 = vector.extract_strided_slice %3 {offsets = [0, 256], sizes = [8, 128], strides = [1, 1]} : vector<8x384xf32> to vector<8x128xf32>
    %cst_4 = arith.constant dense<0.000000e+00> : vector<8x8xf32>
    %7 = tpu.matmul %4, %5, %cst_4 {dimension_numbers = #tpu.dot_dimension_numbers<[1], [1], [0], [0], [0, 0, 1, 0], [], []>} : vector<8x128xf32>, vector<8x128xf32>, vector<8x8xf32> -> vector<8x8xf32>
    %8 = tpu.iota {dimensions = array<i32: 0>} : vector<8x8xi32>
    %9 = tpu.iota {dimensions = array<i32: 1>} : vector<8x8xi32>
    %10 = arith.cmpi sge, %8, %9 : vector<8x8xi32>
    %cst_5 = arith.constant -3.40282347E+38 : f32
    %11 = vector.broadcast %cst_5 : f32 to vector<8x8xf32>
    %12 = arith.select %10, %7, %11 : vector<8x8xi1>, vector<8x8xf32>
    %cst_6 = arith.constant dense<0xFF800000> : vector<8xf32>
    %13 = vector.multi_reduction <maximumf>, %12, %cst_6 [1] : vector<8x8xf32> to vector<8xf32>
    %14 = vector.shape_cast %13 : vector<8xf32> to vector<8x1xf32>
    %15 = vector.broadcast %14 : vector<8x1xf32> to vector<8x8xf32>
    %16 = arith.subf %12, %15 : vector<8x8xf32>
    %17 = math.exp %16 : vector<8x8xf32>
    %cst_7 = arith.constant dense<0.000000e+00> : vector<8xf32>
    %18 = vector.multi_reduction <add>, %17, %cst_7 [1] : vector<8x8xf32> to vector<8xf32>
    %19 = vector.shape_cast %18 : vector<8xf32> to vector<8x1xf32>
    %20 = tpu.reciprocal %19 : vector<8x1xf32> -> vector<8x1xf32>
    %cst_8 = arith.constant 2.500000e-01 : f32
    %21 = vector.broadcast %cst_8 : f32 to vector<8x1xf32>
    %22 = arith.mulf %20, %21 : vector<8x1xf32>
    %23 = vector.broadcast %22 : vector<8x1xf32> to vector<8x8xf32>
    %24 = arith.mulf %17, %23 : vector<8x8xf32>
    %cst_9 = arith.constant dense<0.000000e+00> : vector<8x128xf32>
    %25 = tpu.matmul %24, %6, %cst_9 {dimension_numbers = #tpu.dot_dimension_numbers<[1], [0], [0], [1], [0, 0, 1, 1], [], []>} : vector<8x8xf32>, vector<8x128xf32>, vector<8x128xf32> -> vector<8x128xf32>
    %c0_10 = arith.constant 0 : index
    %c0_11 = arith.constant 0 : index
    %c0_12 = arith.constant 0 : index
    %26 = vector.load %arg3[%c0_10, %c0_11, %c0_12] : memref<1x8x128xf32, #tpu.memory_space<vmem>>, vector<1x8x128xf32>
    %27 = vector.shape_cast %26 : vector<1x8x128xf32> to vector<8x128xf32>
    %28 = vector.shape_cast %25 : vector<8x128xf32> to vector<1x8x128xf32>
    tpu.vector_store %arg3[%c0_10, %c0_11, %c0_12], %28 {strides = array<i32>} : memref<1x8x128xf32, #tpu.memory_space<vmem>>, vector<1x8x128xf32>,
    return
  }
  func.func @transform_0(%arg0: i32) -> (i32, i32, i32) {
    %c0_i32 = arith.constant 0 : i32
    %c0_i32_0 = arith.constant 0 : i32
    %c0_i32_1 = arith.constant 0 : i32
    return %arg0, %c0_i32, %c0_i32_0 : i32, i32, i32
  }
  func.func @transform_1(%arg0: i32) -> (i32, i32) {
    %c0_i32 = arith.constant 0 : i32
    %c0_i32_0 = arith.constant 0 : i32
    %c0_i32_1 = arith.constant 0 : i32
    return %c0_i32, %c0_i32_0 : i32, i32
  }
  func.func @transform_2(%arg0: i32) -> (i32, i32, i32) {
    %c0_i32 = arith.constant 0 : i32
    %c0_i32_0 = arith.constant 0 : i32
    %c0_i32_1 = arith.constant 0 : i32
    return %arg0, %c0_i32, %c0_i32_0 : i32, i32, i32
  }
}

</mosaic_0001>

<llo_original>
// kernel: tpu_custom_call.1
$region0: #{tpu_custom_call.1}
  #allocation0 [shape = 'u32[]', space=smem, size = 0x4, offset = 0x4, fixed_abs, tag = 'smem constant byte address 0x4 - core index']
  #allocation1 [shape = 'u32[72,128]{1,0:T(1,128)}', space=vmem, size = 0x9000, scoped, tag = 'internal scratch']
  %s0 = inlined_call_operand.hbm [shape: f32[2,8,32], index: 0, kind: input, shape index: {}]
  %s1 = inlined_call_operand.hbm [shape: f32[32,384], index: 1, kind: input, shape index: {}]
  %s2 = inlined_call_operand.hbm [shape: f32[2,8,128], index: 2, kind: output, shape index: {}]
  %s3 = sld [smem:[#allocation0]]
  $region49: #{tpu_custom_call.1} parent=0
    _
  %s5 = ssub.s32 1, %s3
  %s6 = scalar_select 0, %s5, %s3
  $region1: #{tpu_custom_call.1} parent=0
    #allocation2 [shape = 'u8[8192]{0}', space=vmem, size = 0x2000, scoped, tag = 'input window, operand 0']
    #allocation3 [shape = 's32[2]{0}', space=sflag, size = 0x8, scoped, tag = 'scoped memory for tpu_custom_call.1']
    #allocation4 [shape = 's32[2]{0}', space=sflag, size = 0x8, scoped, tag = 'scoped memory for tpu_custom_call.1']
    #allocation5 [shape = 'u8[49152]{0}', space=vmem, size = 0xc000, scoped, tag = 'input window, operand 1, single buffered']
    #allocation6 [shape = 's32[1]{0}', space=sflag, size = 0x4, scoped, tag = 'scoped memory for tpu_custom_call.1']
    #allocation7 [shape = 'u8[8192]{0}', space=vmem, size = 0x2000, scoped, tag = 'output window, operand 0']
    %7 = vsyncpa [#allocation3], 0
    %s8 = scalar_lea.sflag [#allocation3], 1
    %9 = vsyncpa %s8, 0
    %10 = vsyncpa [#allocation6], 0
    %11 = vsyncpa [#allocation4], 0
    %s12 = scalar_lea.sflag [#allocation4], 1
    %13 = vsyncpa %s12, 0
    loop: start=0, step=1, limit=4
    $region2: #{tpu_custom_call.1} parent=1 // loop_pre_header
      _
    $region3: #{tpu_custom_call.1} parent=1 // loop_header
      %s15 = sphi 0, %s19
      %p16 = scmp.ge.s32.totalorder %s15, 4
      %s25 = sphi 0, %s27
      %s28 = sphi 0, %s25
      %s29 = sphi 0, %s28
      %s45 = sphi 0, %s29
      %s49 = sphi 0, %s49
      %s51 = sphi 0, %s49
      %s52 = sphi 0, %s51
      %s66 = sphi 0, %s52
      %s72 = sphi 0, %s74
      %s75 = sphi 0, %s72
      %s76 = sphi 0, %s75
      %s92 = sphi 0, %s76
    $region4: #{tpu_custom_call.1} parent=1 // loop_header_branch
      %18 = sbr.rel (%p16) target = $region8
    $region5: #{tpu_custom_call.1} parent=1 // loop_body
      %s20 = ssub.s32 %s15, 1
      %s21 = ssub.s32 %s15, 2
      %s22 = sadd.s32 %s15, 1
      %s23 = ssub.s32 %s15, %s22
      %p24 = scmp.eq.s32.totalorder %s23, 0
      %s26 = sadd.s32 %s25, 1
      %s27 = scalar_select %p24, %s25, %s26
      %p30 = pneg %p24
      %p31 = scmp.eq.s32.totalorder %s15, 1
      %p32 = por %p30, %p31
      %p33 = scmp.ne.s32.totalorder %s25, %s28
      %p34 = scmp.eq.s32.totalorder %s15, 0
      %p35 = por %p33, %p34
      %p36 = scmp.ne.s32.totalorder %s25, %s28
      %p37 = scmp.eq.s32.totalorder %s20, 1
      %p38 = por %p36, %p37
      %p39 = scmp.ne.s32.totalorder %s28, %s29
      %p40 = scmp.eq.s32.totalorder %s20, 0
      %p41 = por %p39, %p40
      %p42 = scmp.ne.s32.totalorder %s28, %s29
      %p43 = scmp.eq.s32.totalorder %s21, 1
      %p44 = por %p42, %p43
      %p46 = scmp.ne.s32.totalorder %s29, %s45
      %p47 = scmp.eq.s32.totalorder %s21, 0
      %p48 = por %p46, %p47
      %s50 = sadd.s32 %s49, 1
      %p53 = scmp.eq.s32.totalorder %s15, 1
      %p54 = scmp.ne.s32.totalorder %s49, %s51
      %p55 = scmp.eq.s32.totalorder %s15, 0
      %p56 = por %p54, %p55
      %p57 = scmp.ne.s32.totalorder %s49, %s51
      %p58 = scmp.eq.s32.totalorder %s20, 1
      %p59 = por %p57, %p58
      %p60 = scmp.ne.s32.totalorder %s51, %s52
      %p61 = scmp.eq.s32.totalorder %s20, 0
      %p62 = por %p60, %p61
      %p63 = scmp.ne.s32.totalorder %s51, %s52
      %p64 = scmp.eq.s32.totalorder %s21, 1
      %p65 = por %p63, %p64
      %p67 = scmp.ne.s32.totalorder %s52, %s66
      %p68 = scmp.eq.s32.totalorder %s21, 0
      %p69 = por %p67, %p68
      %s70 = ssub.s32 %s15, %s22
      %p71 = scmp.eq.s32.totalorder %s70, 0
      %s73 = sadd.s32 %s72, 1
      %s74 = scalar_select %p71, %s72, %s73
      %p77 = pneg %p71
      %p78 = scmp.eq.s32.totalorder %s15, 1
      %p79 = por %p77, %p78
      %p80 = scmp.ne.s32.totalorder %s72, %s75
      %p81 = scmp.eq.s32.totalorder %s15, 0
      %p82 = por %p80, %p81
      %p83 = scmp.ne.s32.totalorder %s72, %s75
      %p84 = scmp.eq.s32.totalorder %s20, 1
      %p85 = por %p83, %p84
      %p86 = scmp.ne.s32.totalorder %s75, %s76
      %p87 = scmp.eq.s32.totalorder %s20, 0
      %p88 = por %p86, %p87
      %p89 = scmp.ne.s32.totalorder %s75, %s76
      %p90 = scmp.eq.s32.totalorder %s21, 1
      %p91 = por %p89, %p90
      %p93 = scmp.ne.s32.totalorder %s76, %s92
      %p94 = scmp.eq.s32.totalorder %s21, 0
      %p95 = por %p93, %p94
      %p96 = scmp.le.s32.totalorder 1, %s15
      %p97 = scmp.lt.s32.totalorder %s15, 3
      %p98 = pnand %p96, %p97
      %p99 = pneg %p98
      // Predicated region
      $region9: #{tpu_custom_call.1} parent=5 // pred_check
        _
      $region10: #{tpu_custom_call.1} parent=5 // pred_check_branch
        %101 = sbr.rel (%p98) target = $region12
      $region11: #{tpu_custom_call.1} parent=5 // pred_region
        %s102 = ssub.s32 %s15, 1
        // Predicated region
        $region13: #{tpu_custom_call.1} parent=11 // pred_check
          %p103 = pneg %p62
        $region14: #{tpu_custom_call.1} parent=11 // pred_check_branch
          %105 = sbr.rel (%p103) target = $region16
        $region15: #{tpu_custom_call.1} parent=11 // pred_region
          %107 = vsyncadd [#allocation6], 0
          %s108 = sshll.u32 %s1, 4
          %s109 = int_to_ptr.hbm [resolvable:$true] %s108
          %s110 = sshll.u32 [#allocation5], 4
          %s111 = int_to_ptr.vmem [resolvable:$true] %s110
          %116 = dma.hbm_to_vmem [thread:$0]  %s109, 1536, %s111, [#allocation6], 384, 384, 24
        $region16: #{tpu_custom_call.1} parent=11 // pred_fallthru
          _
      $region12: #{tpu_custom_call.1} parent=5 // pred_fallthru
        _
      %p117 = scmp.lt.s32.totalorder %s15, 2
      // Predicated region
      $region17: #{tpu_custom_call.1} parent=5 // pred_check
        %p118 = pneg %p117
      $region18: #{tpu_custom_call.1} parent=5 // pred_check_branch
        %120 = sbr.rel (%p118) target = $region20
      $region19: #{tpu_custom_call.1} parent=5 // pred_region
        // Predicated region
        $region21: #{tpu_custom_call.1} parent=19 // pred_check
          %p121 = pneg %p35
        $region22: #{tpu_custom_call.1} parent=19 // pred_check_branch
          %123 = sbr.rel (%p121) target = $region24
        $region23: #{tpu_custom_call.1} parent=19 // pred_region
          %s124 = sand.u32 %s25, 1
          %s125 = scalar_lea.sflag [#allocation3], %s124
          %s126 = sand.u32 %s25, 1
          %s127 = smul.addr %s126, 8
          %s128 = scalar_lea.vmem [#allocation2], %s127
          %130 = vsyncadd %s125, 0
          %s131 = smul.addr %s15, 8
          %s132 = scalar_lea.hbm %s0, %s131
          %s134 = sshll.u32 %s132, 4
          %s135 = int_to_ptr.hbm [resolvable:$true] %s134
          %s136 = sshll.u32 %s128, 4
          %s137 = int_to_ptr.vmem [resolvable:$true] %s136
          %139 = dma.hbm_to_vmem [thread:$0]  %s135, 128, %s137, %s125
        $region24: #{tpu_custom_call.1} parent=19 // pred_fallthru
          _
      $region20: #{tpu_custom_call.1} parent=5 // pred_fallthru
        _
      %p140 = scmp.le.s32.totalorder 1, %s15
      %p141 = scmp.lt.s32.totalorder %s15, 3
      %p142 = pnand %p140, %p141
      %p143 = pneg %p142
      // Predicated region
      $region25: #{tpu_custom_call.1} parent=5 // pred_check
        _
      $region26: #{tpu_custom_call.1} parent=5 // pred_check_branch
        %145 = sbr.rel (%p142) target = $region28
      $region27: #{tpu_custom_call.1} parent=5 // pred_region
        %s146 = ssub.s32 %s15, 1
        %s147 = sand.u32 %s28, 1
        %s148 = scalar_lea.sflag [#allocation3], %s147
        %s149 = sand.u32 %s28, 1
        %s150 = smul.addr %s149, 8
        %s151 = scalar_lea.vmem [#allocation2], %s150
        // Predicated region
        $region29: #{tpu_custom_call.1} parent=27 // pred_check
          %p152 = pneg %p41
        $region30: #{tpu_custom_call.1} parent=27 // pred_check_branch
          %154 = sbr.rel (%p152) target = $region32
        $region31: #{tpu_custom_call.1} parent=27 // pred_region
          %156 = dma.done %s148, 128
        $region32: #{tpu_custom_call.1} parent=27 // pred_fallthru
          _
        // Predicated region
        $region33: #{tpu_custom_call.1} parent=27 // pred_check
          %p157 = pneg %p62
        $region34: #{tpu_custom_call.1} parent=27 // pred_check_branch
          %159 = sbr.rel (%p157) target = $region36
        $region35: #{tpu_custom_call.1} parent=27 // pred_region
          %161 = dma.done [#allocation6], 1536
        $region36: #{tpu_custom_call.1} parent=27 // pred_fallthru
          _
        %s162 = sand.u32 %s28, 1
        %s163 = scalar_lea.sflag [#allocation3], %s162
        %s164 = sand.u32 %s28, 1
        %s165 = smul.addr %s164, 8
        %s166 = scalar_lea.vmem [#allocation2], %s165
        %p167 = pneg %p41
        %p168 = pneg %p38
        %p169 = pneg %p62
        %p170 = pneg %p59
        %p171 = pneg %p88
        %p172 = pneg %p85
        %s173 = sand.u32 %s75, 1
        %s174 = scalar_lea.sflag [#allocation4], %s173
        %s175 = sand.u32 %s75, 1
        %s176 = smul.addr %s175, 8
        %s177 = scalar_lea.vmem [#allocation7], %s176
        %v178 = vld [vmem:[%s151] sm:$0xff]
        %v179 = vld [vmem:[#allocation5] sm:$0xff]
        %v180 = vld [vmem:[#allocation5 + $0x8] sm:$0xff]
        %v181 = vld [vmem:[#allocation5 + $0x10] sm:$0xff]
        %v182 = vld [vmem:[#allocation5 + $0x18] sm:$0xff]
        %v183 = vld [vmem:[#allocation5 + $0x20] sm:$0xff]
        %v184 = vld [vmem:[#allocation5 + $0x28] sm:$0xff]
        %v185 = vld [vmem:[#allocation5 + $0x30] sm:$0xff]
        %v186 = vld [vmem:[#allocation5 + $0x38] sm:$0xff]
        %v187 = vld [vmem:[#allocation5 + $0x40] sm:$0xff]
        %v188 = vld [vmem:[#allocation5 + $0x48] sm:$0xff]
        %v189 = vld [vmem:[#allocation5 + $0x50] sm:$0xff]
        %v190 = vld [vmem:[#allocation5 + $0x58] sm:$0xff]
        %vm191 = vcmask 261120
        %v193 = vsel %vm191, %v178, 0
        %195 = vmatpush.msra.mxu0 0.0
        %196 = vmatpush.msra.mxu0 0.0
        %197 = vmatpush.msra.mxu0 0.0
        %198 = vmatpush.msra.mxu0 0.0
        %199 = vmatpush.msra.mxu0 0.0
        %200 = vmatpush.msra.mxu0 0.0
        %201 = vmatpush.msra.mxu0 0.0
        %202 = vmatpush.msra.mxu0 0.0
        %203 = vmatpush.msra.mxu0 0.0
        %204 = vmatpush.msra.mxu0 0.0
        %205 = vmatpush.msra.mxu0 0.0
        %206 = vmatpush.msra.mxu0 0.0
        %207 = vmatpush.msra.mxu0 %v188
        %208 = vmatpush.msra.mxu0 %v185
        %209 = vmatpush.msra.mxu0 %v182
        %210 = vmatpush.msra.mxu0 %v179
        %211 = vmatmul.f32.gmra.mxu0 %v193
        %v212 = vpop.f32.mrf.mxu0
        %v213 = vadd.f32 0.0, %v212
        %214 = vdwg.mxu0
        %215 = vmatpush.msra.mxu0 0.0
        %216 = vmatpush.msra.mxu0 0.0
        %217 = vmatpush.msra.mxu0 0.0
        %218 = vmatpush.msra.mxu0 0.0
        %219 = vmatpush.msra.mxu0 0.0
        %220 = vmatpush.msra.mxu0 0.0
        %221 = vmatpush.msra.mxu0 0.0
        %222 = vmatpush.msra.mxu0 0.0
        %223 = vmatpush.msra.mxu0 0.0
        %224 = vmatpush.msra.mxu0 0.0
        %225 = vmatpush.msra.mxu0 0.0
        %226 = vmatpush.msra.mxu0 0.0
        %227 = vmatpush.msra.mxu0 %v189
        %228 = vmatpush.msra.mxu0 %v186
        %229 = vmatpush.msra.mxu0 %v183
        %230 = vmatpush.msra.mxu0 %v180
        %231 = vmatmul.f32.gmra.mxu0 %v193
        %v232 = vpop.f32.mrf.mxu0
        %v233 = vadd.f32 0.0, %v232
        %234 = vdwg.mxu0
        %235 = vmatpush.msra.mxu0 0.0
        %236 = vmatpush.msra.mxu0 0.0
        %237 = vmatpush.msra.mxu0 0.0
        %238 = vmatpush.msra.mxu0 0.0
        %239 = vmatpush.msra.mxu0 0.0
        %240 = vmatpush.msra.mxu0 0.0
        %241 = vmatpush.msra.mxu0 0.0
        %242 = vmatpush.msra.mxu0 0.0
        %243 = vmatpush.msra.mxu0 0.0
        %244 = vmatpush.msra.mxu0 0.0
        %245 = vmatpush.msra.mxu0 0.0
        %246 = vmatpush.msra.mxu0 0.0
        %247 = vmatpush.msra.mxu0 %v190
        %248 = vmatpush.msra.mxu0 %v187
        %249 = vmatpush.msra.mxu0 %v184
        %250 = vmatpush.msra.mxu0 %v181
        %251 = vmatmul.f32.gmra.mxu0 %v193
        %v252 = vpop.f32.mrf.mxu0
        %v253 = vadd.f32 0.0, %v252
        %254 = vdwg.mxu0
        %255 = vmatpush.xpose.msra.mxu0 0.0
        %256 = vmatpush.xpose.msra.mxu0 0.0
        %257 = vmatpush.xpose.msra.mxu0 0.0
        %258 = vmatpush.xpose.msra.mxu0 0.0
        %259 = vmatpush.xpose.msra.mxu0 0.0
        %260 = vmatpush.xpose.msra.mxu0 0.0
        %261 = vmatpush.xpose.msra.mxu0 0.0
        %262 = vmatpush.xpose.msra.mxu0 0.0
        %263 = vmatpush.xpose.msra.mxu0 0.0
        %264 = vmatpush.xpose.msra.mxu0 0.0
        %265 = vmatpush.xpose.msra.mxu0 0.0
        %266 = vmatpush.xpose.msra.mxu0 0.0
        %267 = vmatpush.xpose.msra.mxu0 0.0
        %268 = vmatpush.xpose.msra.mxu0 0.0
        %269 = vmatpush.xpose.msra.mxu0 0.0
        %270 = vmatpush.xpose.msra.mxu0 %v233
        %271 = vmatmul.f32.gmra.mxu0 %v213
        %v272 = vpop.f32.mrf.mxu0
        %v273 = vadd.f32 0.0, %v272
        %274 = vdwg.mxu0
        %v275 = vlaneseq
        %v276 = vshrl.u32 %v275, 7
        %v277 = vlaneseq
        %v278 = vand.u32 %v277, 127
        %vm279 = vcmp.ge.s32.totalorder %v276, %v278
        %v280 = vsel %vm279, %v273, -3.4028235e+38
        %vm281 = vcmask 64512
        %v282 = vsel %vm281, %v280, -inf
        %283 = vmax.xlane.f32.xlu0 %v282
        %v284 = vpop.xlane.xlu0 %283
        %v285 = vsub.f32 %v280, %v284
        %v286 = vmul.f32 %v285, 1.442695
        %v287 = vpow.pop %v286
        %v288 = vsel %vm281, %v287, 0.0
        %289 = vadd.xlane.f32.xlu0 %v288
        %v290 = vpop.xlane.xlu0 %289
        %v291 = vrcp.pop %v290
        %v292 = vmul.f32 %v290, %v291
        %v293 = vsub.f32 1.0, %v292
        %v294 = vmul.f32 %v291, %v293
        %v295 = vadd.f32 %v291, %v294
        %vm296 = vweird.f32 %v290
        %vm297 = vweird.f32 %v291
        %vm298 = vmor %vm296, %vm297
        %v299 = vsel %vm298, %v291, %v295
        %v300 = vand.u32 2147483647, %v290
        %vm301 = vcmp.eq.f32.partialorder %v300, 8.507059e+37
        %v302 = vand.u32 %v290, 2147483648
        %v303 = vor.u32 1.1754944e-38, %v302
        %v304 = vsel %vm301, %v303, %v299
        %v305 = vmul.f32 %v304, 0.25
        %v306 = vmul.f32 %v287, %v305
        %v308 = vsel %vm281, %v306, 0
        %310 = vmatpush.msra.mxu0 0.0
        %311 = vmatpush.msra.mxu0 0.0
        %312 = vmatpush.msra.mxu0 0.0
        %313 = vmatpush.msra.mxu0 0.0
        %314 = vmatpush.msra.mxu0 0.0
        %315 = vmatpush.msra.mxu0 0.0
        %316 = vmatpush.msra.mxu0 0.0
        %317 = vmatpush.msra.mxu0 0.0
        %318 = vmatpush.msra.mxu0 0.0
        %319 = vmatpush.msra.mxu0 0.0
        %320 = vmatpush.msra.mxu0 0.0
        %321 = vmatpush.msra.mxu0 0.0
        %322 = vmatpush.msra.mxu0 0.0
        %323 = vmatpush.msra.mxu0 0.0
        %324 = vmatpush.msra.mxu0 0.0
        %325 = vmatpush.msra.mxu0 %v253
        %326 = vmatmul.f32.gmra.mxu0 %v308
        %v327 = vpop.f32.mrf.mxu0
        %v328 = vadd.f32 0.0, %v327
        %329 = vdwg.mxu0
        %330 = vst [vmem:[%s177] sm:$0xff] %v328
        %s331 = sand.u32 %s75, 1
        %s332 = scalar_lea.sflag [#allocation4], %s331
        %s333 = sand.u32 %s75, 1
        %s334 = smul.addr %s333, 8
        %s335 = scalar_lea.vmem [#allocation7], %s334
        // Predicated region
        $region37: #{tpu_custom_call.1} parent=27 // pred_check
          %p336 = pneg %p85
        $region38: #{tpu_custom_call.1} parent=27 // pred_check_branch
          %338 = sbr.rel (%p336) target = $region40
        $region39: #{tpu_custom_call.1} parent=27 // pred_region
          %340 = vsyncadd %s332, 0
          %s341 = smul.addr %s20, 8
          %s342 = scalar_lea.hbm %s2, %s341
          %s344 = sshll.u32 %s335, 4
          %s345 = int_to_ptr.vmem [resolvable:$true] %s344
          %s346 = sshll.u32 %s342, 4
          %s347 = int_to_ptr.hbm [resolvable:$true] %s346
          %349 = dma.vmem_to_hbm [thread:$0]  %s345, 128, %s347, %s332
        $region40: #{tpu_custom_call.1} parent=27 // pred_fallthru
          _
      $region28: #{tpu_custom_call.1} parent=5 // pred_fallthru
        _
      %p350 = scmp.le.s32.totalorder 2, %s15
      // Predicated region
      $region41: #{tpu_custom_call.1} parent=5 // pred_check
        %p351 = pneg %p350
      $region42: #{tpu_custom_call.1} parent=5 // pred_check_branch
        %353 = sbr.rel (%p351) target = $region44
      $region43: #{tpu_custom_call.1} parent=5 // pred_region
        %s354 = ssub.s32 %s15, 2
        // Predicated region
        $region45: #{tpu_custom_call.1} parent=43 // pred_check
          %p355 = pneg %p91
        $region46: #{tpu_custom_call.1} parent=43 // pred_check_branch
          %357 = sbr.rel (%p355) target = $region48
        $region47: #{tpu_custom_call.1} parent=43 // pred_region
          %s358 = sand.u32 %s76, 1
          %s359 = scalar_lea.sflag [#allocation4], %s358
          %s360 = sand.u32 %s76, 1
          %s361 = smul.addr %s360, 8
          %s362 = scalar_lea.vmem [#allocation7], %s361
          %364 = dma.done %s359, 128
        $region48: #{tpu_custom_call.1} parent=43 // pred_fallthru
          _
      $region44: #{tpu_custom_call.1} parent=5 // pred_fallthru
        _
    $region6: #{tpu_custom_call.1} parent=1 // loop_footer
      %s19 = sadd.s32 1, %s15
    $region7: #{tpu_custom_call.1} parent=1 // loop_footer_branch
      %14 = sbr.rel target = $region3
    $region8: #{tpu_custom_call.1} parent=1 // loop_exit
      _
    %365 = vsyncpa [#allocation3], 1
    %s366 = scalar_lea.sflag [#allocation3], 1
    %367 = vsyncpa %s366, 1
    %368 = vsyncpa [#allocation6], 1
    %369 = vsyncpa [#allocation4], 1
    %s370 = scalar_lea.sflag [#allocation4], 1
    %371 = vsyncpa %s370, 1

</llo_original>
